<compile_context>
chip_gen: v6e
topology: v6e:2x2x1
jax: 0.10.0
libtpu: 0.0.40
codegen_flags: <defaults>
</compile_context>

<pallas_src>
import functools

import jax
import jax.numpy as jnp
from jax import lax
from jax.experimental import pallas as pl
from jax.experimental.pallas import tpu as pltpu

_SLACK = 4 << 20


# ---------------------------------------------------------------------------
# Kernels
# ---------------------------------------------------------------------------

def _cam_fused_kernel(x_ref, w1_ref, b1_ref, w2_ref, b2_ref, o_ref, *,
                      s_true, masked):
    """Single pass: full (C, S_pad) maps for TB batch elements in VMEM."""
    x = x_ref[...]                                            # (TB, C, Sp), native dtype

    # Global average pool: pad lanes are zero, so an f32-accumulated sum divided
    # by the true spatial size is exact.  No persistent f32 image of the block.
    avg = jnp.sum(x, axis=-1, dtype=jnp.float32) * (1.0 / s_true)        # (TB, C)

    # Global max pool: mask pad lanes only when padding exists.
    if masked:
        lane = lax.broadcasted_iota(jnp.int32, (1, 1, x.shape[-1]), 2)
        neg = jnp.asarray(jnp.finfo(x_ref.dtype).min, x_ref.dtype)
        xm = jnp.where(lane < s_true, x, neg)
    else:
        xm = x
    mx = jnp.max(xm, axis=-1).astype(jnp.float32)                        # (TB, C)

    # Fused channel MLP: branches stacked along the lane axis with a block-
    # diagonal W1, so both 1x1-conv branches run as two small matmuls with no
    # sublane concats / sub-128 lane slices.
    pooled = jnp.concatenate([avg, mx], axis=1)                          # (TB, 2C)
    h = jnp.dot(pooled, w1_ref[...],
                preferred_element_type=jnp.float32) + b1_ref[...]        # (TB, 2P)
    h = jnp.maximum(h, 0.0)
    logits = jnp.dot(h, w2_ref[...],
                     preferred_element_type=jnp.float32) + b2_ref[...]   # (TB, C)
    att = jax.nn.sigmoid(logits)                                         # (TB, C)

    # Gate the input directly in its native dtype (no f32 block-sized temp).
    o_ref[...] = x * att[:, :, None].astype(x_ref.dtype)


def _cam_reduce_kernel(x_ref, w1_ref, b1_ref, w2_ref, b2_ref, att_ref,
                       sum_ref, max_ref, *, s_true, ts, masked):
    """Tiled pass 1: accumulate sum/max over S tiles, emit the channel gate."""
    s_idx = pl.program_id(1)

    @pl.when(s_idx == 0)
    def _init():
        sum_ref[...] = jnp.zeros_like(sum_ref)
        max_ref[...] = jnp.full_like(max_ref, -jnp.inf)

    x = x_ref[...]                                            # (1, C, TS), native dtype
    sum_ref[...] += jnp.sum(x, axis=-1, dtype=jnp.float32)    # pad lanes are zero
    if masked:
        lane = lax.broadcasted_iota(jnp.int32, (1, 1, ts), 2) + s_idx * ts
        neg = jnp.asarray(jnp.finfo(x_ref.dtype).min, x_ref.dtype)
        x = jnp.where(lane < s_true, x, neg)
    max_ref[...] = jnp.maximum(max_ref[...],
                               jnp.max(x, axis=-1).astype(jnp.float32))

    @pl.when(s_idx == pl.num_programs(1) - 1)
    def _finalize():
        avg = sum_ref[...] * (1.0 / s_true)                              # (1, C)
        pooled = jnp.concatenate([avg, max_ref[...]], axis=1)            # (1, 2C)
        h = jnp.dot(pooled, w1_ref[...],
                    preferred_element_type=jnp.float32) + b1_ref[...]
        h = jnp.maximum(h, 0.0)
        logits = jnp.dot(h, w2_ref[...],
                         preferred_element_type=jnp.float32) + b2_ref[...]
        att_ref[...] = jax.nn.sigmoid(logits)[:, :, None]                # (1, C, 1)


def _cam_scale_kernel(x_ref, att_ref, o_ref):
    """Tiled pass 2: broadcast the per-channel gate over each spatial tile."""
    o_ref[...] = x_ref[...] * att_ref[...].astype(x_ref.dtype)


# ---------------------------------------------------------------------------
# Wrapper helpers
# ---------------------------------------------------------------------------

def _round_up(n, m):
    return ((n + m - 1) // m) * m


def _largest_divisor_leq(n, cap):
    cap = max(1, min(n, int(cap)))
    for d in range(cap, 0, -1):
        if n % d == 0:
            return d
    return 1


def _tpu_vmem_capacity_bytes():
    try:
        info = pltpu.get_tpu_info()
        cap = getattr(info, "vmem_capacity_bytes", None)
        if cap:
            return int(cap)
    except Exception:
        pass
    return 64 << 20          # conservative default (v7x-sized VMEM)


def _fused_weights(params):
    """Fold both 1x1-conv branches into one stacked weight set (branch on lanes)."""
    wa1, wm1 = params["wa1"], params["wm1"]          # (P, C)
    wa2, wm2 = params["wa2"], params["wm2"]          # (C, P)
    planes, C = wa1.shape
    z = jnp.zeros((C, planes), jnp.float32)
    w1 = jnp.concatenate(
        [jnp.concatenate([wa1.T, z], axis=1),
         jnp.concatenate([z, wm1.T], axis=1)], axis=0)                   # (2C, 2P)
    b1 = jnp.concatenate([params["ba1"].T, params["bm1"].T], axis=1)     # (1, 2P)
    w2 = jnp.concatenate([wa2.T, wm2.T], axis=0)                         # (2P, C)
    b2 = (params["ba2"] + params["bm2"]).T                               # (1, C)
    return w1, b1, w2, b2


def _cam_fused(x_flat, w1, b1, w2, b2, *, s_true, s_pad, tb, budget, w_bytes,
               planes):
    """Single-pass path: one HBM read + one HBM write of x."""
    B, C, _ = x_flat.shape
    itemsize = jnp.dtype(x_flat.dtype).itemsize
    masked = s_pad != s_true
    if masked:
        # Lane-dense blocks: pad/slice are two cheap XLA passes but every kernel
        # store becomes an unmasked full-lane vst and DMAs stay dense.
        x_flat = jnp.pad(x_flat, ((0, 0), (0, 0), (0, s_pad - s_true)))

    blk1 = C * s_pad * itemsize
    f32_blk1 = C * s_pad * 4                 # in-kernel f32 transient allowance
    grid_steps = B // tb

    # Deeper input buffering when the budget allows and the grid is deep enough.
    n_in_buf = 2
    if (grid_steps >= 3 and
            tb * (5 * blk1 + f32_blk1) + 2 * w_bytes + _SLACK <= budget):
        n_in_buf = 3

    vmem_need = tb * ((n_in_buf + 2) * blk1 + f32_blk1) + 2 * w_bytes + _SLACK
    vmem_limit = int(min(max(vmem_need, 32 << 20), budget))

    if n_in_buf == 3:
        x_spec = pl.BlockSpec((tb, C, s_pad), lambda i: (i, 0, 0),
                              pipeline_mode=pl.Buffered(3))
    else:
        x_spec = pl.BlockSpec((tb, C, s_pad), lambda i: (i, 0, 0))

    out_pad = pl.pallas_call(
        functools.partial(_cam_fused_kernel, s_true=s_true, masked=masked),
        out_shape=jax.ShapeDtypeStruct((B, C, s_pad), x_flat.dtype),
        grid=(grid_steps,),
        in_specs=[x_spec,
                  pl.BlockSpec(w1.shape, lambda i: (0, 0)),
                  pl.BlockSpec(b1.shape, lambda i: (0, 0)),
                  pl.BlockSpec(w2.shape, lambda i: (0, 0)),
                  pl.BlockSpec(b2.shape, lambda i: (0, 0))],
        out_specs=pl.BlockSpec((tb, C, s_pad), lambda i: (i, 0, 0)),
        compiler_params=pltpu.CompilerParams(
            dimension_semantics=("parallel",),
            vmem_limit_bytes=vmem_limit),
        cost_estimate=pl.CostEstimate(
            flops=int(3 * B * C * s_true + 12 * B * C * planes),
            transcendentals=int(B * C),
            bytes_accessed=int(2 * B * C * s_pad * itemsize + w_bytes)),
    )(x_flat, w1, b1, w2, b2)

    if masked:
        out_pad = out_pad[:, :, :s_true]
    return out_pad


def _cam_tiled(x_flat, w1, b1, w2, b2, *, s_true, budget, big_vmem, w_bytes,
               planes):
    """Two-pass spatially tiled path: reduce kernel (sum/max accumulators over an
    'arbitrary' S axis, gate computed at the last S step), then a scale kernel.
    Costs one extra HBM read of x but keeps 2-8 MiB double-buffered blocks and a
    multi-step grid regardless of C*S (v7x: 64 MiB VMEM, 2 TensorCores)."""
    B, C, S = x_flat.shape
    itemsize = jnp.dtype(x_flat.dtype).itemsize

    tile_target = (8 << 20) if big_vmem else (4 << 20)
    ts_bytes = min(tile_target, max(budget - 2 * w_bytes - _SLACK, 1 << 20) // 6)
    s_128 = _round_up(S, 128)
    ts = min(s_128, max(128, (ts_bytes // (C * itemsize)) // 128 * 128))
    s_pad = _round_up(S, ts)
    n_s = s_pad // ts
    masked = s_pad != s_true
    if masked:
        x_flat = jnp.pad(x_flat, ((0, 0), (0, 0), (0, s_pad - s_true)))

    blk = C * ts * itemsize
    f32_blk = C * ts * 4
    reduce_limit = int(min(max(2 * blk + f32_blk + 2 * w_bytes + 16 * C * 4
                               + _SLACK, 32 << 20), budget))
    scale_limit = int(min(max(4 * blk + f32_blk + 16 * C * 4 + _SLACK,
                              32 << 20), budget))

    att = pl.pallas_call(
        functools.partial(_cam_reduce_kernel, s_true=s_true, ts=ts,
                          masked=masked),
        out_shape=jax.ShapeDtypeStruct((B, C, 1), jnp.float32),
        grid=(B, n_s),
        in_specs=[pl.BlockSpec((1, C, ts), lambda b, s: (b, 0, s)),
                  pl.BlockSpec(w1.shape, lambda b, s: (0, 0)),
                  pl.BlockSpec(b1.shape, lambda b, s: (0, 0)),
                  pl.BlockSpec(w2.shape, lambda b, s: (0, 0)),
                  pl.BlockSpec(b2.shape, lambda b, s: (0, 0))],
        out_specs=pl.BlockSpec((1, C, 1), lambda b, s: (b, 0, 0)),
        scratch_shapes=[pltpu.VMEM((1, C), jnp.float32),
                        pltpu.VMEM((1, C), jnp.float32)],
        compiler_params=pltpu.CompilerParams(
            dimension_semantics=("parallel", "arbitrary"),
            vmem_limit_bytes=reduce_limit),
        cost_estimate=pl.CostEstimate(
            flops=int(2 * B * C * s_true + 12 * B * C * planes),
            transcendentals=int(B * C),
            bytes_accessed=int(B * C * s_pad * itemsize + w_bytes + B * C * 4)),
    )(x_flat, w1, b1, w2, b2)

    out_pad = pl.pallas_call(
        _cam_scale_kernel,
        out_shape=jax.ShapeDtypeStruct((B, C, s_pad), x_flat.dtype),
        grid=(B, n_s),
        in_specs=[pl.BlockSpec((1, C, ts), lambda b, s: (b, 0, s)),
                  pl.BlockSpec((1, C, 1), lambda b, s: (b, 0, 0))],
        out_specs=pl.BlockSpec((1, C, ts), lambda b, s: (b, 0, s)),
        compiler_params=pltpu.CompilerParams(
            dimension_semantics=("parallel", "parallel"),
            vmem_limit_bytes=scale_limit),
        cost_estimate=pl.CostEstimate(
            flops=int(B * C * s_true),
            transcendentals=0,
            bytes_accessed=int(2 * B * C * s_pad * itemsize + B * C * 4)),
    )(x_flat, att)

    if masked:
        out_pad = out_pad[:, :, :s_true]
    return out_pad


def cam_block(x, params, *, force_tiled=False, target_block_bytes=None):
    """x: (B, C, H, W); params: the 8 conv weights/biases (2D). Returns (B,C,H,W)."""
    B, C, H, W = x.shape
    S = H * W
    x_flat = x.reshape(B, C, S)
    planes = params["wa1"].shape[0]
    w1, b1, w2, b2 = _fused_weights(params)

    itemsize = jnp.dtype(x.dtype).itemsize
    w_bytes = 4 * (w1.size + b1.size + w2.size + b2.size)
    vmem_cap = _tpu_vmem_capacity_bytes()
    budget = max(vmem_cap - (8 << 20), 32 << 20)     # headroom below physical VMEM
    big_vmem = vmem_cap >= (96 << 20)                # v5e / v6e (128 MiB parts)

    # Lane-dense layout: pad the spatial axis to a multiple of 128 if needed.
    s_pad = _round_up(S, 128)
    blk1 = C * s_pad * itemsize                      # one batch element's block
    f32_blk1 = C * s_pad * 4                         # f32 transient allowance
    per_batch = 4 * blk1 + f32_blk1                  # in+out double-buffered + temp

    target_block = target_block_bytes or ((16 << 20) if big_vmem else (6 << 20))
    avail = budget - 2 * w_bytes - _SLACK
    feasible = avail >= per_batch

    TB = None
    if feasible:
        TB = _largest_divisor_leq(
            B, min(avail // per_batch, max(1, target_block // blk1)))
        # Prefer >=2 grid steps (pipeline overlap + v7x megacore) when the split
        # blocks stay big enough to keep DMAs efficient.
        if B > 1 and B // TB == 1:
            half = _largest_divisor_leq(B, max(1, B // 2))
            if half * blk1 >= (1 << 20):
                TB = half

    total_bytes = B * C * S * itemsize
    # TODO(synk): on v7x, B==1 maps below 16 MiB still run the fused path on one
    # TensorCore; below that size the tiled path's extra HBM read does not pay.
    use_tiled = force_tiled or (not feasible) or (
        (not big_vmem) and (B // TB == 1) and total_bytes >= (16 << 20))

    if use_tiled:
        out_flat = _cam_tiled(x_flat, w1, b1, w2, b2, s_true=S, budget=budget,
                              big_vmem=big_vmem, w_bytes=w_bytes, planes=planes)
    else:
        out_flat = _cam_fused(x_flat, w1, b1, w2, b2, s_true=S, s_pad=s_pad,
                              tb=TB, budget=budget, w_bytes=w_bytes,
                              planes=planes)
    return out_flat.reshape(B, C, H, W)


# ---------------------------------------------------------------------------
# Reference + params
# ---------------------------------------------------------------------------

def cam_block_ref(x, params):
    """Pure-JAX reference with the same semantics as the PyTorch module."""
    avg = jnp.mean(x, axis=(2, 3), keepdims=True)            # (B, C, 1, 1)
    mx = jnp.max(x, axis=(2, 3), keepdims=True)              # (B, C, 1, 1)

    def mlp(v, w1, b1, w2, b2):
        v = v[:, :, 0, 0]                                    # (B, C)
        h = v @ w1.T + b1[:, 0]                              # (B, P)
        h = jnp.maximum(h, 0.0)
        o = h @ w2.T + b2[:, 0]                              # (B, C)
        return o[:, :, None, None]

    a = mlp(avg, params["wa1"], params["ba1"], params["wa2"], params["ba2"])
    m = mlp(mx, params["wm1"], params["bm1"], params["wm2"], params["bm2"])
    return x * jax.nn.sigmoid(a + m)


def init_params(key, inplanes, redr):
    planes = inplanes // redr
    ks = jax.random.split(key, 8)
    scale1 = 1.0 / jnp.sqrt(inplanes)
    scale2 = 1.0 / jnp.sqrt(planes)
    return {
        "wa1": jax.random.normal(ks[0], (planes, inplanes), jnp.float32) * scale1,
        "ba1": jax.random.normal(ks[1], (planes, 1), jnp.float32) * scale1,
        "wa2": jax.random.normal(ks[2], (inplanes, planes), jnp.float32) * scale2,
        "ba2": jax.random.normal(ks[3], (inplanes, 1), jnp.float32) * scale2,
        "wm1": jax.random.normal(ks[4], (planes, inplanes), jnp.float32) * scale1,
        "bm1": jax.random.normal(ks[5], (planes, 1), jnp.float32) * scale1,
        "wm2": jax.random.normal(ks[6], (inplanes, planes), jnp.float32) * scale2,
        "bm2": jax.random.normal(ks[7], (inplanes, 1), jnp.float32) * scale2,
    }


if __name__ == "__main__":
    B, C, H, W = 2, 32, 16, 16      # inplanes=32
    redr = 4                        # planes=8

    key = jax.random.PRNGKey(0)
    kx, kp = jax.random.split(key)
    x = jax.random.normal(kx, (B, C, H, W), jnp.float32)
    params = init_params(kp, C, redr)

    # 1) Fused path, f32, lane-aligned spatial size (S = 256).
    out = jax.block_until_ready(cam_block(x, params))
    ref = cam_block_ref(x, params)
    assert out.shape == (B, C, H, W)
    assert jnp.allclose(out, ref, atol=1e-5, rtol=1e-5), "f32 mismatch"

    # 2) Fused path, non-lane-aligned spatial size (S = 49): padded lane-dense
    #    blocks + masked max.
    x2 = jax.random.normal(kx, (B, C, 7, 7), jnp.float32)
    out2 = jax.block_until_ready(cam_block(x2, params))
    ref2 = cam_block_ref(x2, params)
    assert jnp.allclose(out2, ref2, atol=1e-5, rtol=1e-5), "S=49 mismatch"

    # 3) bf16 activations: no in-kernel f32 block copy; gate multiply in bf16.
    xb = x.astype(jnp.bfloat16)
    outb = jax.block_until_ready(cam_block(xb, params))
    refb = cam_block_ref(xb.astype(jnp.float32), params).astype(jnp.bfloat16)
    assert outb.dtype == jnp.bfloat16
    assert jnp.allclose(outb.astype(jnp.float32), refb.astype(jnp.float32),
                        atol=3e-2, rtol=3e-2), "bf16 mismatch"

    # 4) Spatially-tiled two-pass path (the large-C*S / v7x fallback), aligned S.
    out3 = jax.block_until_ready(cam_block(x, params, force_tiled=True))
    assert jnp.allclose(out3, ref, atol=1e-5, rtol=1e-5), "tiled mismatch"

    # 5) Tiled path with padded / masked spatial size.
    out4 = jax.block_until_ready(cam_block(x2, params, force_tiled=True))
    assert jnp.allclose(out4, ref2, atol=1e-5, rtol=1e-5), "tiled S=49 mismatch"

    # 6) Multi-step fused grid (exercises Buffered(3) input pipelining).
    x5 = jax.random.normal(kx, (8, C, 16, 16), jnp.float32)
    out5 = jax.block_until_ready(
        cam_block(x5, params, target_block_bytes=C * 256 * 4))
    ref5 = cam_block_ref(x5, params)
    assert jnp.allclose(out5, ref5, atol=1e-5, rtol=1e-5), "Buffered(3) mismatch"

    print("KERNEL_OK")
</pallas_src>

<mosaic_0001>
module attributes {stable_mosaic.version = 11 : i64} {
  func.func @_cam_fused_kernel(%arg0: i32, %arg1: memref<2x32x256xf32, #tpu.memory_space<vmem>>, %arg2: memref<64x16xf32, #tpu.memory_space<vmem>>, %arg3: memref<1x16xf32, #tpu.memory_space<vmem>>, %arg4: memref<16x32xf32, #tpu.memory_space<vmem>>, %arg5: memref<1x32xf32, #tpu.memory_space<vmem>>, %arg6: memref<2x32x256xf32, #tpu.memory_space<vmem>>) attributes {dimension_semantics = [#tpu.dimension_semantics<parallel>], iteration_bounds = array<i64: 1>, scalar_prefetch = 0 : i64, scratch_operands = 0 : i64, tpu.core_type = #tpu.core_type<tc>, window_params = [{transform_indices = @transform_0, window_bounds = array<i64: 2, 32, 256>}, {pipeline_mode = #tpu.pipeline_mode<synchronous>, transform_indices = @transform_1, window_bounds = array<i64: 64, 16>}, {pipeline_mode = #tpu.pipeline_mode<synchronous>, transform_indices = @transform_2, window_bounds = array<i64: 1, 16>}, {pipeline_mode = #tpu.pipeline_mode<synchronous>, transform_indices = @transform_3, window_bounds = array<i64: 16, 32>}, {pipeline_mode = #tpu.pipeline_mode<synchronous>, transform_indices = @transform_4, window_bounds = array<i64: 1, 32>}, {transform_indices = @transform_5, window_bounds = array<i64: 2, 32, 256>}]} {
    %c0 = arith.constant 0 : index
    %c0_0 = arith.constant 0 : index
    %c0_1 = arith.constant 0 : index
    %0 = vector.load %arg1[%c0, %c0_0, %c0_1] : memref<2x32x256xf32, #tpu.memory_space<vmem>>, vector<2x32x256xf32>
    %cst = arith.constant dense<0.000000e+00> : vector<2x32xf32>
    %1 = vector.multi_reduction <add>, %0, %cst [2] : vector<2x32x256xf32> to vector<2x32xf32>
    %cst_2 = arith.constant 3.906250e-03 : f32
    %2 = vector.broadcast %cst_2 : f32 to vector<2x32xf32>
    %3 = arith.mulf %1, %2 : vector<2x32xf32>
    %cst_3 = arith.constant dense<0xFF800000> : vector<2x32xf32>
    %4 = vector.multi_reduction <maximumf>, %0, %cst_3 [2] : vector<2x32x256xf32> to vector<2x32xf32>
    %5 = tpu.concatenate %3, %4 in 1 : vector<2x32xf32>, vector<2x32xf32> -> vector<2x64xf32>
    %c0_4 = arith.constant 0 : index
    %c0_5 = arith.constant 0 : index
    %6 = vector.load %arg2[%c0_4, %c0_5] : memref<64x16xf32, #tpu.memory_space<vmem>>, vector<64x16xf32>
    %cst_6 = arith.constant dense<0.000000e+00> : vector<2x16xf32>
    %7 = tpu.matmul %5, %6, %cst_6 {dimension_numbers = #tpu.dot_dimension_numbers<[1], [0], [0], [1], [0, 0, 1, 1], [], []>} : vector<2x64xf32>, vector<64x16xf32>, vector<2x16xf32> -> vector<2x16xf32>
    %c0_7 = arith.constant 0 : index
    %c0_8 = arith.constant 0 : index
    %8 = vector.load %arg3[%c0_7, %c0_8] : memref<1x16xf32, #tpu.memory_space<vmem>>, vector<1x16xf32>
    %9 = vector.broadcast %8 : vector<1x16xf32> to vector<2x16xf32>
    %10 = arith.addf %7, %9 : vector<2x16xf32>
    %cst_9 = arith.constant 0.000000e+00 : f32
    %11 = vector.broadcast %cst_9 : f32 to vector<2x16xf32>
    %12 = arith.maximumf %10, %11 : vector<2x16xf32>
    %c0_10 = arith.constant 0 : index
    %c0_11 = arith.constant 0 : index
    %13 = vector.load %arg4[%c0_10, %c0_11] : memref<16x32xf32, #tpu.memory_space<vmem>>, vector<16x32xf32>
    %cst_12 = arith.constant dense<0.000000e+00> : vector<2x32xf32>
    %14 = tpu.matmul %12, %13, %cst_12 {dimension_numbers = #tpu.dot_dimension_numbers<[1], [0], [0], [1], [0, 0, 1, 1], [], []>} : vector<2x16xf32>, vector<16x32xf32>, vector<2x32xf32> -> vector<2x32xf32>
    %c0_13 = arith.constant 0 : index
    %c0_14 = arith.constant 0 : index
    %15 = vector.load %arg5[%c0_13, %c0_14] : memref<1x32xf32, #tpu.memory_space<vmem>>, vector<1x32xf32>
    %16 = vector.broadcast %15 : vector<1x32xf32> to vector<2x32xf32>
    %17 = arith.addf %14, %16 : vector<2x32xf32>
    %18 = arith.negf %17 : vector<2x32xf32>
    %19 = math.exp %18 : vector<2x32xf32>
    %cst_15 = arith.constant 1.000000e+00 : f32
    %20 = vector.broadcast %cst_15 : f32 to vector<2x32xf32>
    %21 = arith.addf %20, %19 : vector<2x32xf32>
    %22 = arith.divf %20, %21 : vector<2x32xf32>
    %23 = vector.shape_cast %22 : vector<2x32xf32> to vector<2x32x1xf32>
    %24 = vector.broadcast %23 : vector<2x32x1xf32> to vector<2x32x256xf32>
    %25 = arith.mulf %0, %24 : vector<2x32x256xf32>
    %c0_16 = arith.constant 0 : index
    %c0_17 = arith.constant 0 : index
    %c0_18 = arith.constant 0 : index
    %26 = vector.load %arg6[%c0_16, %c0_17, %c0_18] : memref<2x32x256xf32, #tpu.memory_space<vmem>>, vector<2x32x256xf32>
    tpu.vector_store %arg6[%c0_16, %c0_17, %c0_18], %25 {strides = array<i32>} : memref<2x32x256xf32, #tpu.memory_space<vmem>>, vector<2x32x256xf32>,
    return
  }
  func.func @transform_0(%arg0: i32) -> (i32, i32, i32) {
    %c0_i32 = arith.constant 0 : i32
    %c0_i32_0 = arith.constant 0 : i32
    %c0_i32_1 = arith.constant 0 : i32
    return %arg0, %c0_i32, %c0_i32_0 : i32, i32, i32
  }
  func.func @transform_1(%arg0: i32) -> (i32, i32) {
    %c0_i32 = arith.constant 0 : i32
    %c0_i32_0 = arith.constant 0 : i32
    %c0_i32_1 = arith.constant 0 : i32
    return %c0_i32, %c0_i32_0 : i32, i32
  }
  func.func @transform_2(%arg0: i32) -> (i32, i32) {
    %c0_i32 = arith.constant 0 : i32
    %c0_i32_0 = arith.constant 0 : i32
    %c0_i32_1 = arith.constant 0 : i32
    return %c0_i32, %c0_i32_0 : i32, i32
  }
  func.func @transform_3(%arg0: i32) -> (i32, i32) {
    %c0_i32 = arith.constant 0 : i32
    %c0_i32_0 = arith.constant 0 : i32
    %c0_i32_1 = arith.constant 0 : i32
    return %c0_i32, %c0_i32_0 : i32, i32
  }
  func.func @transform_4(%arg0: i32) -> (i32, i32) {
    %c0_i32 = arith.constant 0 : i32
    %c0_i32_0 = arith.constant 0 : i32
    %c0_i32_1 = arith.constant 0 : i32
    return %c0_i32, %c0_i32_0 : i32, i32
  }
  func.func @transform_5(%arg0: i32) -> (i32, i32, i32) {
    %c0_i32 = arith.constant 0 : i32
    %c0_i32_0 = arith.constant 0 : i32
    %c0_i32_1 = arith.constant 0 : i32
    return %arg0, %c0_i32, %c0_i32_0 : i32, i32, i32
  }
}

</mosaic_0001>

<llo_original>
// kernel: tpu_custom_call.1
$region0: #{tpu_custom_call.1}
  #allocation0 [shape = 'u32[]', space=smem, size = 0x4, offset = 0x4, fixed_abs, tag = 'smem constant byte address 0x4 - core index']
  #allocation1 [shape = 'u32[144,128]{1,0:T(1,128)}', space=vmem, size = 0x12000, scoped, tag = 'internal scratch']
  %s0 = inlined_call_operand.hbm [shape: f32[2,32,256], index: 0, kind: input, shape index: {}]
  %s1 = inlined_call_operand.vmem [shape: f32[64,16], index: 1, kind: input, shape index: {}]
  %s2 = inlined_call_operand.vmem [shape: f32[1,16], index: 2, kind: input, shape index: {}]
  %s3 = inlined_call_operand.vmem [shape: f32[16,32], index: 3, kind: input, shape index: {}]
  %s4 = inlined_call_operand.vmem [shape: f32[1,32], index: 4, kind: input, shape index: {}]
  %s5 = inlined_call_operand.hbm [shape: f32[2,32,256], index: 5, kind: output, shape index: {}]
  %s6 = sld [smem:[#allocation0]]
  $region34: #{tpu_custom_call.1} parent=0
    _
  %s8 = ssub.s32 1, %s6
  %s9 = scalar_select 0, %s8, %s6
  $region1: #{tpu_custom_call.1} parent=0
    #allocation2 [shape = 'u8[65536]{0}', space=vmem, size = 0x10000, scoped, tag = 'input window, operand 0, single buffered']
    #allocation3 [shape = 's32[1]{0}', space=sflag, size = 0x4, scoped, tag = 'scoped memory for tpu_custom_call.1']
    #allocation4 [shape = 's32[1]{0}', space=sflag, size = 0x4, scoped, tag = 'scoped memory for tpu_custom_call.1']
    #allocation5 [shape = 'u8[65536]{0}', space=vmem, size = 0x10000, scoped, tag = 'output window, operand 0, single buffered']
    %10 = vsyncpa [#allocation3], 0
    %11 = vsyncpa [#allocation4], 0
    // Predicated region
    $region2: #{tpu_custom_call.1} parent=1 // pred_check
      _
    $region3: #{tpu_custom_call.1} parent=1 // pred_check_branch
      %13 = sbr.rel (0) target = $region5
    $region4: #{tpu_custom_call.1} parent=1 // pred_region
      %s15 = ssub.s32 2048, 2048
      %16 = vsyncadd [#allocation3], %s15
      %s17 = sshll.u32 [#allocation2], 4
      %s18 = int_to_ptr.vmem [resolvable:$true] %s17
      %23 = dma.hbm_to_vmem [thread:$0]  %s0, 2048, %s18, [#allocation3], 256, 256, 16
    $region5: #{tpu_custom_call.1} parent=1 // pred_fallthru
      _
    // Predicated region
    $region6: #{tpu_custom_call.1} parent=1 // pred_check
      _
    $region7: #{tpu_custom_call.1} parent=1 // pred_check_branch
      %25 = sbr.rel (0) target = $region9
    $region8: #{tpu_custom_call.1} parent=1 // pred_region
      _
    $region9: #{tpu_custom_call.1} parent=1 // pred_fallthru
      _
    // Predicated region
    $region10: #{tpu_custom_call.1} parent=1 // pred_check
      _
    $region11: #{tpu_custom_call.1} parent=1 // pred_check_branch
      %27 = sbr.rel (0) target = $region13
    $region12: #{tpu_custom_call.1} parent=1 // pred_region
      _
    $region13: #{tpu_custom_call.1} parent=1 // pred_fallthru
      _
    // Predicated region
    $region14: #{tpu_custom_call.1} parent=1 // pred_check
      _
    $region15: #{tpu_custom_call.1} parent=1 // pred_check_branch
      %29 = sbr.rel (0) target = $region17
    $region16: #{tpu_custom_call.1} parent=1 // pred_region
      _
    $region17: #{tpu_custom_call.1} parent=1 // pred_fallthru
      _
    // Predicated region
    $region18: #{tpu_custom_call.1} parent=1 // pred_check
      _
    $region19: #{tpu_custom_call.1} parent=1 // pred_check_branch
      %31 = sbr.rel (0) target = $region21
    $region20: #{tpu_custom_call.1} parent=1 // pred_region
      _
    $region21: #{tpu_custom_call.1} parent=1 // pred_fallthru
      _
    // Predicated region
    $region22: #{tpu_custom_call.1} parent=1 // pred_check
      _
    $region23: #{tpu_custom_call.1} parent=1 // pred_check_branch
      %33 = sbr.rel (0) target = $region25
    $region24: #{tpu_custom_call.1} parent=1 // pred_region
      %34 = dma.done [#allocation3], 2048
    $region25: #{tpu_custom_call.1} parent=1 // pred_fallthru
      _
    %v35 = vld [vmem:[#allocation2] sm:$0xff]
    %v36 = vld [vmem:[#allocation2 + $0x8] sm:$0xff]
    %v37 = vld [vmem:[#allocation2 + $0x10] sm:$0xff]
    %v38 = vld [vmem:[#allocation2 + $0x18] sm:$0xff]
    %v39 = vld [vmem:[#allocation2 + $0x20] sm:$0xff]
    %v40 = vld [vmem:[#allocation2 + $0x28] sm:$0xff]
    %v41 = vld [vmem:[#allocation2 + $0x30] sm:$0xff]
    %v42 = vld [vmem:[#allocation2 + $0x38] sm:$0xff]
    %v43 = vld [vmem:[#allocation2 + $0x40] sm:$0xff]
    %v44 = vld [vmem:[#allocation2 + $0x48] sm:$0xff]
    %v45 = vld [vmem:[#allocation2 + $0x50] sm:$0xff]
    %v46 = vld [vmem:[#allocation2 + $0x58] sm:$0xff]
    %v47 = vld [vmem:[#allocation2 + $0x60] sm:$0xff]
    %v48 = vld [vmem:[#allocation2 + $0x68] sm:$0xff]
    %v49 = vld [vmem:[#allocation2 + $0x70] sm:$0xff]
    %v50 = vld [vmem:[#allocation2 + $0x78] sm:$0xff]
    %v51 = vadd.f32 %v35, %v36
    %52 = vadd.xlane.f32.xlu0 %v51
    %v53 = vpop.xlane.xlu0 %52
    %v54 = vadd.f32 %v37, %v38
    %55 = vadd.xlane.f32.xlu0 %v54
    %v56 = vpop.xlane.xlu0 %55
    %v57 = vadd.f32 %v39, %v40
    %58 = vadd.xlane.f32.xlu0 %v57
    %v59 = vpop.xlane.xlu0 %58
    %v60 = vadd.f32 %v41, %v42
    %61 = vadd.xlane.f32.xlu0 %v60
    %v62 = vpop.xlane.xlu0 %61
    %v63 = vadd.f32 %v43, %v44
    %64 = vadd.xlane.f32.xlu0 %v63
    %v65 = vpop.xlane.xlu0 %64
    %v66 = vadd.f32 %v45, %v46
    %67 = vadd.xlane.f32.xlu0 %v66
    %v68 = vpop.xlane.xlu0 %67
    %v69 = vadd.f32 %v47, %v48
    %70 = vadd.xlane.f32.xlu0 %v69
    %v71 = vpop.xlane.xlu0 %70
    %v72 = vadd.f32 %v49, %v50
    %73 = vadd.xlane.f32.xlu0 %v72
    %v74 = vpop.xlane.xlu0 %73
    %v75 = vmul.f32 %v53, 0.00390625
    %v76 = vmul.f32 %v56, 0.00390625
    %v77 = vmul.f32 %v59, 0.00390625
    %v78 = vmul.f32 %v62, 0.00390625
    %v79 = vmul.f32 %v65, 0.00390625
    %v80 = vmul.f32 %v68, 0.00390625
    %v81 = vmul.f32 %v71, 0.00390625
    %v82 = vmul.f32 %v74, 0.00390625
    %v83 = vmax.f32 %v35, %v36
    %84 = vmax.xlane.f32.xlu0 %v83
    %v85 = vpop.xlane.xlu0 %84
    %v86 = vmax.f32 %v37, %v38
    %87 = vmax.xlane.f32.xlu0 %v86
    %v88 = vpop.xlane.xlu0 %87
    %v89 = vmax.f32 %v39, %v40
    %90 = vmax.xlane.f32.xlu0 %v89
    %v91 = vpop.xlane.xlu0 %90
    %v92 = vmax.f32 %v41, %v42
    %93 = vmax.xlane.f32.xlu0 %v92
    %v94 = vpop.xlane.xlu0 %93
    %v95 = vmax.f32 %v43, %v44
    %96 = vmax.xlane.f32.xlu0 %v95
    %v97 = vpop.xlane.xlu0 %96
    %v98 = vmax.f32 %v45, %v46
    %99 = vmax.xlane.f32.xlu0 %v98
    %v100 = vpop.xlane.xlu0 %99
    %v101 = vmax.f32 %v47, %v48
    %102 = vmax.xlane.f32.xlu0 %v101
    %v103 = vpop.xlane.xlu0 %102
    %v104 = vmax.f32 %v49, %v50
    %105 = vmax.xlane.f32.xlu0 %v104
    %v106 = vpop.xlane.xlu0 %105
    %v115 = vlaneseq
    %v116 = vand.u32 %v115, 127
    %v117 = vlaneseq
    %v118 = vshrl.u32 %v117, 7
    %v119 = vsub.s32 %v116, %v118
    %v120 = vrot.slane %v75, %v119
    %v121 = vadd.s32 %v116, 4294967288
    %v122 = vlaneseq
    %v123 = vshrl.u32 %v122, 7
    %v124 = vsub.s32 %v121, %v123
    %v125 = vrot.slane %v76, %v124
    %vm126 = vcmask 130112
    %v127 = vsel %vm126, %v125, %v120
    %v128 = vadd.s32 %v116, 4294967280
    %v129 = vlaneseq
    %v130 = vshrl.u32 %v129, 7
    %v131 = vsub.s32 %v128, %v130
    %v132 = vrot.slane %v77, %v131
    %vm133 = vcmask 195712
    %v134 = vsel %vm133, %v132, %v127
    %v135 = vadd.s32 %v116, 4294967272
    %v136 = vlaneseq
    %v137 = vshrl.u32 %v136, 7
    %v138 = vsub.s32 %v135, %v137
    %v139 = vrot.slane %v78, %v138
    %vm140 = vcmask 261312
    %v141 = vsel %vm140, %v139, %v134
    %v142 = vlaneseq
    %v143 = vshrl.u32 %v142, 7
    %v144 = vsub.s32 %v116, %v143
    %v145 = vrot.slane %v79, %v144
    %v146 = vlaneseq
    %v147 = vshrl.u32 %v146, 7
    %v148 = vsub.s32 %v121, %v147
    %v149 = vrot.slane %v80, %v148
    %v150 = vsel %vm126, %v149, %v145
    %v151 = vlaneseq
    %v152 = vshrl.u32 %v151, 7
    %v153 = vsub.s32 %v128, %v152
    %v154 = vrot.slane %v81, %v153
    %v155 = vsel %vm133, %v154, %v150
    %v156 = vlaneseq
    %v157 = vshrl.u32 %v156, 7
    %v158 = vsub.s32 %v135, %v157
    %v159 = vrot.slane %v82, %v158
    %v160 = vsel %vm140, %v159, %v155
    %vm161 = vcmask 1041409
    %v162 = vsel %vm161, %v160, %v141
    %v172 = vadd.s32 %v116, 4294967264
    %v173 = vlaneseq
    %v174 = vshrl.u32 %v173, 7
    %v175 = vsub.s32 %v172, %v174
    %v176 = vrot.slane %v85, %v175
    %v177 = vadd.s32 %v116, 4294967256
    %v178 = vlaneseq
    %v179 = vshrl.u32 %v178, 7
    %v180 = vsub.s32 %v177, %v179
    %v181 = vrot.slane %v88, %v180
    %vm182 = vcmask 392512
    %v183 = vsel %vm182, %v181, %v176
    %v184 = vadd.s32 %v116, 4294967248
    %v185 = vlaneseq
    %v186 = vshrl.u32 %v185, 7
    %v187 = vsub.s32 %v184, %v186
    %v188 = vrot.slane %v91, %v187
    %vm189 = vcmask 458112
    %v190 = vsel %vm189, %v188, %v183
    %v191 = vadd.s32 %v116, 4294967240
    %v192 = vlaneseq
    %v193 = vshrl.u32 %v192, 7
    %v194 = vsub.s32 %v191, %v193
    %v195 = vrot.slane %v94, %v194
    %vm196 = vcmask 523712
    %v197 = vsel %vm196, %v195, %v190
    %v198 = vlaneseq
    %v199 = vshrl.u32 %v198, 7
    %v200 = vsub.s32 %v172, %v199
    %v201 = vrot.slane %v97, %v200
    %v202 = vlaneseq
    %v203 = vshrl.u32 %v202, 7
    %v204 = vsub.s32 %v177, %v203
    %v205 = vrot.slane %v100, %v204
    %v206 = vsel %vm182, %v205, %v201
    %v207 = vlaneseq
    %v208 = vshrl.u32 %v207, 7
    %v209 = vsub.s32 %v184, %v208
    %v210 = vrot.slane %v103, %v209
    %v211 = vsel %vm189, %v210, %v206
    %v212 = vlaneseq
    %v213 = vshrl.u32 %v212, 7
    %v214 = vsub.s32 %v191, %v213
    %v215 = vrot.slane %v106, %v214
    %v216 = vsel %vm196, %v215, %v211
    %v217 = vsel %vm161, %v216, %v197
    %vm219 = vcmask 261120
    %v220 = vsel %vm219, %v162, %v217
    %v221 = vld [vmem:[%s1] sm:$0xff]
    %v222 = vld [vmem:[%s1 + $0x8] sm:$0xff]
    %v223 = vld [vmem:[%s1 + $0x10] sm:$0xff]
    %v224 = vld [vmem:[%s1 + $0x18] sm:$0xff]
    %v225 = vld [vmem:[%s1 + $0x20] sm:$0xff]
    %v226 = vld [vmem:[%s1 + $0x28] sm:$0xff]
    %v227 = vld [vmem:[%s1 + $0x30] sm:$0xff]
    %v228 = vld [vmem:[%s1 + $0x38] sm:$0xff]
    %v229 = vld [vmem:[%s2] sm:$0x1]
    %v231 = vlaneseq
    %v232 = vshrl.u32 %v231, 7
    %v233 = vsub.s32 0, %v232
    %v234 = vrot.slane %v229, %v233
    %vm236 = vcmask 523264
    %v238 = vsel %vm236, %v220, 0
    %240 = vmatprep.subr.mxu0 0.0
    %241 = vmatpush1.msra.mxu0 0.0
    %242 = vmatprep.subr.mxu0 0.0
    %243 = vmatpush1.msra.mxu0 0.0
    %244 = vmatprep.subr.mxu0 0.0
    %245 = vmatpush1.msra.mxu0 0.0
    %246 = vmatprep.subr.mxu0 0.0
    %247 = vmatpush1.msra.mxu0 0.0
    %248 = vmatprep.subr.mxu0 0.0
    %249 = vmatpush1.msra.mxu0 0.0
    %250 = vmatprep.subr.mxu0 0.0
    %251 = vmatpush1.msra.mxu0 0.0
    %252 = vmatprep.subr.mxu0 0.0
    %253 = vmatpush1.msra.mxu0 0.0
    %254 = vmatprep.subr.mxu0 0.0
    %255 = vmatpush1.msra.mxu0 0.0
    %256 = vmatprep.subr.mxu0 0.0
    %257 = vmatpush1.msra.mxu0 %v228
    %258 = vmatprep.subr.mxu0 0.0
    %259 = vmatpush1.msra.mxu0 %v227
    %260 = vmatprep.subr.mxu0 0.0
    %261 = vmatpush1.msra.mxu0 %v226
    %262 = vmatprep.subr.mxu0 0.0
    %263 = vmatpush1.msra.mxu0 %v225
    %264 = vmatprep.subr.mxu0 0.0
    %265 = vmatpush1.msra.mxu0 %v224
    %266 = vmatprep.subr.mxu0 0.0
    %267 = vmatpush1.msra.mxu0 %v223
    %268 = vmatprep.subr.mxu0 0.0
    %269 = vmatpush1.msra.mxu0 %v222
    %270 = vmatprep.subr.mxu0 0.0
    %271 = vmatpush1.msra.mxu0 %v221
    %272 = vmatprep.subr.mxu0 0.0
    %273 = vmatpush2.msra.mxu0 0.0
    %274 = vmatprep.subr.mxu0 0.0
    %275 = vmatpush2.msra.mxu0 0.0
    %276 = vmatprep.subr.mxu0 0.0
    %277 = vmatpush2.msra.mxu0 0.0
    %278 = vmatprep.subr.mxu0 0.0
    %279 = vmatpush2.msra.mxu0 0.0
    %280 = vmatprep.subr.mxu0 0.0
    %281 = vmatpush2.msra.mxu0 0.0
    %282 = vmatprep.subr.mxu0 0.0
    %283 = vmatpush2.msra.mxu0 0.0
    %284 = vmatprep.subr.mxu0 0.0
    %285 = vmatpush2.msra.mxu0 0.0
    %286 = vmatprep.subr.mxu0 0.0
    %287 = vmatpush2.msra.mxu0 0.0
    %288 = vmatprep.subr.mxu0 0.0
    %289 = vmatpush2.msra.mxu0 0.0
    %290 = vmatprep.subr.mxu0 0.0
    %291 = vmatpush2.msra.mxu0 0.0
    %292 = vmatprep.subr.mxu0 0.0
    %293 = vmatpush2.msra.mxu0 0.0
    %294 = vmatprep.subr.mxu0 0.0
    %295 = vmatpush2.msra.mxu0 0.0
    %296 = vmatprep.subr.mxu0 0.0
    %297 = vmatpush2.msra.mxu0 0.0
    %298 = vmatprep.subr.mxu0 0.0
    %299 = vmatpush2.msra.mxu0 0.0
    %300 = vmatprep.subr.mxu0 0.0
    %301 = vmatpush2.msra.mxu0 0.0
    %302 = vmatprep.subr.mxu0 0.0
    %303 = vmatpush2.msra.mxu0 0.0
    %304 = vmatprep.mubr.f32.mxu0 0.0
    %305 = vmatmul.mubr.f32.gmra.mxu0 %v238
    %v306 = vpop.f32.mrf.mxu0
    %v307 = vadd.f32 %v234, %v306
    %v308 = vpop.f32.mrf.mxu0
    %309 = vdwg.mxu0
    %v310 = vmax.f32 %v307, 0.0
    %v311 = vld [vmem:[%s3] sm:$0xff]
    %v312 = vld [vmem:[%s3 + $0x8] sm:$0xff]
    %v313 = vld [vmem:[%s4] sm:$0x1]
    %v315 = vlaneseq
    %v316 = vshrl.u32 %v315, 7
    %v317 = vsub.s32 0, %v316
    %v318 = vrot.slane %v313, %v317
    %vm320 = vcmask 130048
    %v322 = vsel %vm320, %v310, 0
    %324 = vmatprep.subr.mxu0 0.0
    %325 = vmatpush1.msra.mxu0 0.0
    %326 = vmatprep.subr.mxu0 0.0
    %327 = vmatpush1.msra.mxu0 0.0
    %328 = vmatprep.subr.mxu0 0.0
    %329 = vmatpush1.msra.mxu0 0.0
    %330 = vmatprep.subr.mxu0 0.0
    %331 = vmatpush1.msra.mxu0 0.0
    %332 = vmatprep.subr.mxu0 0.0
    %333 = vmatpush1.msra.mxu0 0.0
    %334 = vmatprep.subr.mxu0 0.0
    %335 = vmatpush1.msra.mxu0 0.0
    %336 = vmatprep.subr.mxu0 0.0
    %337 = vmatpush1.msra.mxu0 0.0
    %338 = vmatprep.subr.mxu0 0.0
    %339 = vmatpush1.msra.mxu0 0.0
    %340 = vmatprep.subr.mxu0 0.0
    %341 = vmatpush1.msra.mxu0 0.0
    %342 = vmatprep.subr.mxu0 0.0
    %343 = vmatpush1.msra.mxu0 0.0
    %344 = vmatprep.subr.mxu0 0.0
    %345 = vmatpush1.msra.mxu0 0.0
    %346 = vmatprep.subr.mxu0 0.0
    %347 = vmatpush1.msra.mxu0 0.0
    %348 = vmatprep.subr.mxu0 0.0
    %349 = vmatpush1.msra.mxu0 0.0
    %350 = vmatprep.subr.mxu0 0.0
    %351 = vmatpush1.msra.mxu0 0.0
    %352 = vmatprep.subr.mxu0 0.0
    %353 = vmatpush1.msra.mxu0 %v312
    %354 = vmatprep.subr.mxu0 0.0
    %355 = vmatpush1.msra.mxu0 %v311
    %356 = vmatprep.subr.mxu0 0.0
    %357 = vmatpush2.msra.mxu0 0.0
    %358 = vmatprep.subr.mxu0 0.0
    %359 = vmatpush2.msra.mxu0 0.0
    %360 = vmatprep.subr.mxu0 0.0
    %361 = vmatpush2.msra.mxu0 0.0
    %362 = vmatprep.subr.mxu0 0.0
    %363 = vmatpush2.msra.mxu0 0.0
    %364 = vmatprep.subr.mxu0 0.0
    %365 = vmatpush2.msra.mxu0 0.0
    %366 = vmatprep.subr.mxu0 0.0
    %367 = vmatpush2.msra.mxu0 0.0
    %368 = vmatprep.subr.mxu0 0.0
    %369 = vmatpush2.msra.mxu0 0.0
    %370 = vmatprep.subr.mxu0 0.0
    %371 = vmatpush2.msra.mxu0 0.0
    %372 = vmatprep.subr.mxu0 0.0
    %373 = vmatpush2.msra.mxu0 0.0
    %374 = vmatprep.subr.mxu0 0.0
    %375 = vmatpush2.msra.mxu0 0.0
    %376 = vmatprep.subr.mxu0 0.0
    %377 = vmatpush2.msra.mxu0 0.0
    %378 = vmatprep.subr.mxu0 0.0
    %379 = vmatpush2.msra.mxu0 0.0
    %380 = vmatprep.subr.mxu0 0.0
    %381 = vmatpush2.msra.mxu0 0.0
    %382 = vmatprep.subr.mxu0 0.0
    %383 = vmatpush2.msra.mxu0 0.0
    %384 = vmatprep.subr.mxu0 0.0
    %385 = vmatpush2.msra.mxu0 0.0
    %386 = vmatprep.subr.mxu0 0.0
    %387 = vmatpush2.msra.mxu0 0.0
    %388 = vmatprep.mubr.f32.mxu0 0.0
    %389 = vmatmul.mubr.f32.gmra.mxu0 %v322
    %v390 = vpop.f32.mrf.mxu0
    %v391 = vadd.f32 %v318, %v390
    %v392 = vpop.f32.mrf.mxu0
    %393 = vdwg.mxu0
    %v394 = vxor.u32 %v391, 2147483648
    %v395 = vmul.f32 %v394, 1.442695
    %v396 = vpow.pop %v395
    %v397 = vadd.f32 %v396, 1.0
    %v398 = vrcp.pop %v397
    %v399 = vmul.f32 1.0, %v398
    %v400 = vlaneseq
    %v401 = vshrl.u32 %v400, 7
    %v402 = vsub.s32 0, %v401
    %v403 = vrot.slane %v399, %v402
    %405 = vbcast.lane.b32.xlu0 %v403, 256
    %v406 = vpop.permute.xlu0 %405
    %s408 = sor.u32 256, 8
    %409 = vbcast.lane.b32.xlu0 %v403, %s408
    %v410 = vpop.permute.xlu0 %409
    %s412 = sor.u32 256, 16
    %413 = vbcast.lane.b32.xlu0 %v403, %s412
    %v414 = vpop.permute.xlu0 %413
    %s416 = sor.u32 256, 24
    %417 = vbcast.lane.b32.xlu0 %v403, %s416
    %v418 = vpop.permute.xlu0 %417
    %v419 = vlaneseq
    %v420 = vshrl.u32 %v419, 7
    %v421 = vsub.s32 1, %v420
    %v422 = vrot.slane %v399, %v421
    %424 = vbcast.lane.b32.xlu0 %v422, 256
    %v425 = vpop.permute.xlu0 %424
    %s427 = sor.u32 256, 8
    %428 = vbcast.lane.b32.xlu0 %v422, %s427
    %v429 = vpop.permute.xlu0 %428
    %s431 = sor.u32 256, 16
    %432 = vbcast.lane.b32.xlu0 %v422, %s431
    %v433 = vpop.permute.xlu0 %432
    %s435 = sor.u32 256, 24
    %436 = vbcast.lane.b32.xlu0 %v422, %s435
    %v437 = vpop.permute.xlu0 %436
    %v438 = vmul.f32 %v35, %v406
    %v439 = vmul.f32 %v36, %v406
    %v440 = vmul.f32 %v37, %v410
    %v441 = vmul.f32 %v38, %v410
    %v442 = vmul.f32 %v39, %v414
    %v443 = vmul.f32 %v40, %v414
    %v444 = vmul.f32 %v41, %v418
    %v445 = vmul.f32 %v42, %v418
    %v446 = vmul.f32 %v43, %v425
    %v447 = vmul.f32 %v44, %v425
    %v448 = vmul.f32 %v45, %v429
    %v449 = vmul.f32 %v46, %v429
    %v450 = vmul.f32 %v47, %v433
    %v451 = vmul.f32 %v48, %v433
    %v452 = vmul.f32 %v49, %v437
    %v453 = vmul.f32 %v50, %v437
    %454 = vst [vmem:[#allocation5] sm:$0xff] %v438
    %455 = vst [vmem:[#allocation5 + $0x8] sm:$0xff] %v439
    %456 = vst [vmem:[#allocation5 + $0x10] sm:$0xff] %v440
    %457 = vst [vmem:[#allocation5 + $0x18] sm:$0xff] %v441
    %458 = vst [vmem:[#allocation5 + $0x20] sm:$0xff] %v442
    %459 = vst [vmem:[#allocation5 + $0x28] sm:$0xff] %v443
    %460 = vst [vmem:[#allocation5 + $0x30] sm:$0xff] %v444
    %461 = vst [vmem:[#allocation5 + $0x38] sm:$0xff] %v445
    %462 = vst [vmem:[#allocation5 + $0x40] sm:$0xff] %v446
    %463 = vst [vmem:[#allocation5 + $0x48] sm:$0xff] %v447
    %464 = vst [vmem:[#allocation5 + $0x50] sm:$0xff] %v448
    %465 = vst [vmem:[#allocation5 + $0x58] sm:$0xff] %v449
    %466 = vst [vmem:[#allocation5 + $0x60] sm:$0xff] %v450
    %467 = vst [vmem:[#allocation5 + $0x68] sm:$0xff] %v451
    %468 = vst [vmem:[#allocation5 + $0x70] sm:$0xff] %v452
    %469 = vst [vmem:[#allocation5 + $0x78] sm:$0xff] %v453
    // Predicated region
    $region26: #{tpu_custom_call.1} parent=1 // pred_check
      _
    $region27: #{tpu_custom_call.1} parent=1 // pred_check_branch
      %471 = sbr.rel (0) target = $region29
    $region28: #{tpu_custom_call.1} parent=1 // pred_region
      %s473 = ssub.s32 2048, 2048
      %474 = vsyncadd [#allocation4], %s473
      %s475 = sshll.u32 [#allocation5], 4
      %s476 = int_to_ptr.vmem [resolvable:$true] %s475
      %481 = dma.vmem_to_hbm [thread:$0]  %s476, 2048, %s5, [#allocation4], 256, 256, 16
    $region29: #{tpu_custom_call.1} parent=1 // pred_fallthru
      _
    // Predicated region
    $region30: #{tpu_custom_call.1} parent=1 // pred_check
      _
    $region31: #{tpu_custom_call.1} parent=1 // pred_check_branch
      %483 = sbr.rel (0) target = $region33
    $region32: #{tpu_custom_call.1} parent=1 // pred_region
      %484 = dma.done [#allocation4], 2048
    $region33: #{tpu_custom_call.1} parent=1 // pred_fallthru
      _
    %485 = vsyncpa [#allocation3], 1
    %486 = vsyncpa [#allocation4], 1

</llo_original>
